<compile_context>
chip_gen: v5e
topology: v5e:2x2
jax: 0.10.0
libtpu: 0.0.40
codegen_flags: <defaults>
</compile_context>

<pallas_src>
import functools

import jax
import jax.numpy as jnp
from jax.experimental import pallas as pl
from jax.experimental.pallas import tpu as pltpu


def _round_up(x, m):
    return (x + m - 1) // m * m


# ----------------------------------------------------------------------------
# Kernel 1: feature projection  P = X @ W   (row-tiled, weights resident)
# ----------------------------------------------------------------------------
def _proj_kernel(x_ref, w_ref, o_ref):
    o_ref[...] = jnp.dot(
        x_ref[...], w_ref[...], preferred_element_type=jnp.float32
    ).astype(o_ref.dtype)


def _project(x, w, *, tile_m, out_dtype):
    n, f_in = x.shape
    f_out = w.shape[1]
    return pl.pallas_call(
        _proj_kernel,
        out_shape=jax.ShapeDtypeStruct((n, f_out), out_dtype),
        grid_spec=pltpu.PrefetchScalarGridSpec(
            num_scalar_prefetch=0,
            grid=(n // tile_m,),
            in_specs=[
                pl.BlockSpec((tile_m, f_in), lambda i: (i, 0)),
                pl.BlockSpec((f_in, f_out), lambda i: (0, 0)),  # resident weight
            ],
            out_specs=pl.BlockSpec((tile_m, f_out), lambda i: (i, 0)),
        ),
        compiler_params=pltpu.CompilerParams(dimension_semantics=("parallel",)),
    )(x, w)


# ----------------------------------------------------------------------------
# Kernel 2: neighborhood aggregation  O = A @ M + b  (optional ReLU)
#   grid = (row tiles [parallel], k tiles [arbitrary, last]),
#   f32 VMEM accumulator, bias/ReLU only in the finalize step.
# ----------------------------------------------------------------------------
def _aggregate_kernel(a_ref, m_ref, b_ref, o_ref, acc_ref, *, apply_relu):
    k = pl.program_id(1)

    @pl.when(k == 0)
    def _():
        acc_ref[...] = jnp.zeros_like(acc_ref)

    acc_ref[...] += jnp.dot(
        a_ref[...], m_ref[...], preferred_element_type=jnp.float32
    )

    @pl.when(k == pl.num_programs(1) - 1)
    def _():
        out = acc_ref[...] + b_ref[...]
        if apply_relu:
            out = jnp.maximum(out, 0.0)
        o_ref[...] = out.astype(o_ref.dtype)


def _aggregate(a, m, b, *, tile_m, tile_k, apply_relu, out_dtype):
    n = a.shape[0]
    f = m.shape[1]
    kern = functools.partial(_aggregate_kernel, apply_relu=apply_relu)
    return pl.pallas_call(
        kern,
        out_shape=jax.ShapeDtypeStruct((n, f), out_dtype),
        grid_spec=pltpu.PrefetchScalarGridSpec(
            num_scalar_prefetch=0,
            grid=(n // tile_m, n // tile_k),
            in_specs=[
                pl.BlockSpec((tile_m, tile_k), lambda i, k: (i, k)),  # A tile
                pl.BlockSpec((tile_k, f), lambda i, k: (k, 0)),       # M k-slab
                pl.BlockSpec((1, f), lambda i, k: (0, 0)),            # bias
            ],
            out_specs=pl.BlockSpec((tile_m, f), lambda i, k: (i, 0)),
            scratch_shapes=[pltpu.VMEM((tile_m, f), jnp.float32)],
        ),
        compiler_params=pltpu.CompilerParams(
            dimension_semantics=("parallel", "arbitrary")
        ),
    )(a, m, b)


# ----------------------------------------------------------------------------
# Forward:  h = relu(A_hat @ (X @ W1) + b1);  out = A_hat @ (h @ W2) + b2
# (F.dropout(p=0.5, training=False) is an identity -> eval-mode forward)
# ----------------------------------------------------------------------------
def gcn_forward(a_hat, x, w1, b1, w2, b2, *, compute_dtype=jnp.float32):
    n = x.shape[0]
    f_in, hidden = w1.shape
    out_dim = w2.shape[1]

    # Tile plan: 128-aligned for small N, 256-aligned for larger N (fills the
    # 2x256^2 MXUs on v6e/v7x). Both choices keep double-buffered tiles far
    # under the default scoped VMEM limit on every generation (incl. v7x 64MiB).
    tile = 256 if n > 512 else 128
    n_pad = _round_up(n, tile)
    f_in_pad = _round_up(f_in, 128)
    h_pad = _round_up(hidden, 128)
    o_pad = _round_up(out_dim, 128)

    a_p = jnp.pad(a_hat, ((0, n_pad - n), (0, n_pad - n))).astype(compute_dtype)
    x_p = jnp.pad(x, ((0, n_pad - n), (0, f_in_pad - f_in))).astype(compute_dtype)
    w1_p = jnp.pad(w1, ((0, f_in_pad - f_in), (0, h_pad - hidden))).astype(compute_dtype)
    b1_p = jnp.pad(b1.reshape(1, -1), ((0, 0), (0, h_pad - hidden))).astype(jnp.float32)
    w2_p = jnp.pad(w2, ((0, h_pad - hidden), (0, o_pad - out_dim))).astype(compute_dtype)
    b2_p = jnp.pad(b2.reshape(1, -1), ((0, 0), (0, o_pad - out_dim))).astype(jnp.float32)

    # Layer 1: project once (hoisted out of the A-tiled loop), then aggregate.
    xw1 = _project(x_p, w1_p, tile_m=tile, out_dtype=compute_dtype)
    h = _aggregate(a_p, xw1, b1_p, tile_m=tile, tile_k=tile,
                   apply_relu=True, out_dtype=compute_dtype)
    # TODO(synk): F.dropout(p=0.5) only acts in training mode; eval forward is identity.

    # Layer 2.
    hw2 = _project(h, w2_p, tile_m=tile, out_dtype=compute_dtype)
    out = _aggregate(a_p, hw2, b2_p, tile_m=tile, tile_k=tile,
                     apply_relu=False, out_dtype=jnp.float32)
    return out[:n, :out_dim]


# ----------------------------------------------------------------------------
# Glue: GCN symmetric normalization of edge_index -> dense A_hat (plain JAX),
# matching torch_geometric GCNConv (add_remaining_self_loops + D^-1/2 A D^-1/2).
# ----------------------------------------------------------------------------
def gcn_norm_dense_adj(edge_index, num_nodes):
    row, col = edge_index[0], edge_index[1]  # source, target
    a = jnp.zeros((num_nodes, num_nodes), jnp.float32).at[col, row].add(1.0)
    # add_remaining_self_loops: add a weight-1 self loop only where none exists.
    diag = jnp.diagonal(a)
    a = a + jnp.diag(jnp.where(diag == 0.0, 1.0, 0.0))
    # NOTE: duplicate edges accumulate weight, mirroring repeated messages.
    deg = a.sum(axis=1)
    dinv = jnp.where(deg > 0, jax.lax.rsqrt(deg), 0.0)
    return a * dinv[:, None] * dinv[None, :]


def glorot(key, shape):
    fan_in, fan_out = shape
    limit = jnp.sqrt(6.0 / (fan_in + fan_out))
    return jax.random.uniform(key, shape, jnp.float32, -limit, limit)


def _reference(a_hat, x, w1, b1, w2, b2):
    h = jnp.maximum(a_hat @ (x @ w1) + b1.reshape(1, -1), 0.0)
    return a_hat @ (h @ w2) + b2.reshape(1, -1)


def _make_case(key, num_nodes, num_edges, input_dim, hidden_dim, output_dim):
    k_x, k_e, k_w1, k_b1, k_w2, k_b2 = jax.random.split(key, 6)
    x = jax.random.normal(k_x, (num_nodes, input_dim), jnp.float32)
    src = jax.random.randint(k_e, (num_edges,), 0, num_nodes, jnp.int32)
    dst = jnp.roll(src, 3)
    edge_index = jnp.stack(
        [jnp.concatenate([src, dst]), jnp.concatenate([dst, src])], axis=0
    )
    w1 = glorot(k_w1, (input_dim, hidden_dim))
    b1 = 0.1 * jax.random.normal(k_b1, (hidden_dim,), jnp.float32)
    w2 = glorot(k_w2, (hidden_dim, output_dim))
    b2 = 0.1 * jax.random.normal(k_b2, (output_dim,), jnp.float32)
    a_hat = gcn_norm_dense_adj(edge_index, num_nodes)
    return a_hat, x, w1, b1, w2, b2


if __name__ == "__main__":
    key = jax.random.PRNGKey(0)
    k1, k2 = jax.random.split(key)

    # Case 1: small shapes consistent with the module's forward (single tile).
    n1, fin, hid, fout = 16, 8, 16, 8
    a_hat, x, w1, b1, w2, b2 = _make_case(k1, n1, 20, fin, hid, fout)
    out = jax.block_until_ready(gcn_forward(a_hat, x, w1, b1, w2, b2))
    ref = _reference(a_hat, x, w1, b1, w2, b2)
    assert out.shape == (n1, fout)
    assert jnp.allclose(out, ref, atol=1e-5, rtol=1e-5)

    # Case 2: larger node count to exercise the multi-tile (row, k) grid and
    # the VMEM accumulator across k steps.
    n2 = 300
    a_hat2, x2, w1_2, b1_2, w2_2, b2_2 = _make_case(k2, n2, 900, fin, hid, fout)
    out2 = jax.block_until_ready(gcn_forward(a_hat2, x2, w1_2, b1_2, w2_2, b2_2))
    ref2 = _reference(a_hat2, x2, w1_2, b1_2, w2_2, b2_2)
    assert out2.shape == (n2, fout)
    assert jnp.allclose(out2, ref2, atol=1e-4, rtol=1e-4)

    print("KERNEL_OK")
</pallas_src>

<mosaic_0001>
module attributes {stable_mosaic.version = 11 : i64} {
  func.func @_proj_kernel(%arg0: i32, %arg1: memref<128x128xf32, #tpu.memory_space<vmem>>, %arg2: memref<128x128xf32, #tpu.memory_space<vmem>>, %arg3: memref<128x128xf32, #tpu.memory_space<vmem>>) attributes {dimension_semantics = [#tpu.dimension_semantics<parallel>], iteration_bounds = array<i64: 1>, scalar_prefetch = 0 : i64, scratch_operands = 0 : i64, tpu.core_type = #tpu.core_type<tc>, window_params = [{transform_indices = @transform_0, window_bounds = array<i64: 128, 128>}, {pipeline_mode = #tpu.pipeline_mode<synchronous>, transform_indices = @transform_1, window_bounds = array<i64: 128, 128>}, {transform_indices = @transform_2, window_bounds = array<i64: 128, 128>}]} {
    %c0 = arith.constant 0 : index
    %c0_0 = arith.constant 0 : index
    %0 = vector.load %arg1[%c0, %c0_0] : memref<128x128xf32, #tpu.memory_space<vmem>>, vector<128x128xf32>
    %c0_1 = arith.constant 0 : index
    %c0_2 = arith.constant 0 : index
    %1 = vector.load %arg2[%c0_1, %c0_2] : memref<128x128xf32, #tpu.memory_space<vmem>>, vector<128x128xf32>
    %cst = arith.constant dense<0.000000e+00> : vector<128x128xf32>
    %2 = tpu.matmul %0, %1, %cst {dimension_numbers = #tpu.dot_dimension_numbers<[1], [0], [0], [1], [0, 0, 1, 1], [], []>} : vector<128x128xf32>, vector<128x128xf32>, vector<128x128xf32> -> vector<128x128xf32>
    %c0_3 = arith.constant 0 : index
    %c0_4 = arith.constant 0 : index
    %3 = vector.load %arg3[%c0_3, %c0_4] : memref<128x128xf32, #tpu.memory_space<vmem>>, vector<128x128xf32>
    tpu.vector_store %arg3[%c0_3, %c0_4], %2 {strides = array<i32>} : memref<128x128xf32, #tpu.memory_space<vmem>>, vector<128x128xf32>,
    return
  }
  func.func @transform_0(%arg0: i32) -> (i32, i32) {
    %c0_i32 = arith.constant 0 : i32
    %c0_i32_0 = arith.constant 0 : i32
    return %arg0, %c0_i32 : i32, i32
  }
  func.func @transform_1(%arg0: i32) -> (i32, i32) {
    %c0_i32 = arith.constant 0 : i32
    %c0_i32_0 = arith.constant 0 : i32
    %c0_i32_1 = arith.constant 0 : i32
    return %c0_i32, %c0_i32_0 : i32, i32
  }
  func.func @transform_2(%arg0: i32) -> (i32, i32) {
    %c0_i32 = arith.constant 0 : i32
    %c0_i32_0 = arith.constant 0 : i32
    return %arg0, %c0_i32 : i32, i32
  }
}

</mosaic_0001>

<llo_original>
// kernel: tpu_custom_call.1
$region0: #{tpu_custom_call.1}
  #allocation0 [shape = 'u32[]', space=smem, size = 0x4, offset = 0x4, fixed_abs, tag = 'smem constant byte address 0x4 - core index']
  #allocation1 [shape = 'u32[72,128]{1,0:T(1,128)}', space=vmem, size = 0x9000, scoped, tag = 'internal scratch']
  %s0 = inlined_call_operand.hbm [shape: f32[128,128], index: 0, kind: input, shape index: {}]
  %s1 = inlined_call_operand.hbm [shape: f32[128,128], index: 1, kind: input, shape index: {}]
  %s2 = inlined_call_operand.hbm [shape: f32[128,128], index: 2, kind: output, shape index: {}]
  %s3 = sld [smem:[#allocation0]]
  $region26: #{tpu_custom_call.1} parent=0
    _
  %s5 = ssub.s32 1, %s3
  %s6 = scalar_select 0, %s5, %s3
  $region1: #{tpu_custom_call.1} parent=0
    #allocation2 [shape = 'u8[65536]{0}', space=vmem, size = 0x10000, scoped, tag = 'input window, operand 0, single buffered']
    #allocation3 [shape = 's32[1]{0}', space=sflag, size = 0x4, scoped, tag = 'scoped memory for tpu_custom_call.1']
    #allocation4 [shape = 's32[1]{0}', space=sflag, size = 0x4, scoped, tag = 'scoped memory for tpu_custom_call.1']
    #allocation5 [shape = 'u8[65536]{0}', space=vmem, size = 0x10000, scoped, tag = 'input window, operand 1, single buffered']
    #allocation6 [shape = 's32[1]{0}', space=sflag, size = 0x4, scoped, tag = 'scoped memory for tpu_custom_call.1']
    #allocation7 [shape = 'u8[65536]{0}', space=vmem, size = 0x10000, scoped, tag = 'output window, operand 0, single buffered']
    %7 = vsyncpa [#allocation3], 0
    %8 = vsyncpa [#allocation6], 0
    %9 = vsyncpa [#allocation4], 0
    // Predicated region
    $region2: #{tpu_custom_call.1} parent=1 // pred_check
      _
    $region3: #{tpu_custom_call.1} parent=1 // pred_check_branch
      %11 = sbr.rel (0) target = $region5
    $region4: #{tpu_custom_call.1} parent=1 // pred_region
      %13 = vsyncadd [#allocation3], 0
      %s14 = sshll.u32 %s0, 4
      %s15 = int_to_ptr.hbm [resolvable:$true] %s14
      %s16 = sshll.u32 [#allocation2], 4
      %s17 = int_to_ptr.vmem [resolvable:$true] %s16
      %22 = dma.hbm_to_vmem [thread:$0]  %s15, 2048, %s17, [#allocation3], 128, 128, 8
    $region5: #{tpu_custom_call.1} parent=1 // pred_fallthru
      _
    // Predicated region
    $region6: #{tpu_custom_call.1} parent=1 // pred_check
      _
    $region7: #{tpu_custom_call.1} parent=1 // pred_check_branch
      %24 = sbr.rel (0) target = $region9
    $region8: #{tpu_custom_call.1} parent=1 // pred_region
      %26 = vsyncadd [#allocation6], 0
      %s27 = sshll.u32 %s1, 4
      %s28 = int_to_ptr.hbm [resolvable:$true] %s27
      %s29 = sshll.u32 [#allocation5], 4
      %s30 = int_to_ptr.vmem [resolvable:$true] %s29
      %35 = dma.hbm_to_vmem [thread:$0]  %s28, 2048, %s30, [#allocation6], 128, 128, 8
    $region9: #{tpu_custom_call.1} parent=1 // pred_fallthru
      _
    // Predicated region
    $region10: #{tpu_custom_call.1} parent=1 // pred_check
      _
    $region11: #{tpu_custom_call.1} parent=1 // pred_check_branch
      %37 = sbr.rel (0) target = $region13
    $region12: #{tpu_custom_call.1} parent=1 // pred_region
      %39 = dma.done [#allocation3], 2048
    $region13: #{tpu_custom_call.1} parent=1 // pred_fallthru
      _
    // Predicated region
    $region14: #{tpu_custom_call.1} parent=1 // pred_check
      _
    $region15: #{tpu_custom_call.1} parent=1 // pred_check_branch
      %41 = sbr.rel (0) target = $region17
    $region16: #{tpu_custom_call.1} parent=1 // pred_region
      %43 = dma.done [#allocation6], 2048
    $region17: #{tpu_custom_call.1} parent=1 // pred_fallthru
      _
    %v44 = vld [vmem:[#allocation2] sm:$0xff]
    %v45 = vld [vmem:[#allocation2 + $0x8] sm:$0xff]
    %v46 = vld [vmem:[#allocation2 + $0x10] sm:$0xff]
    %v47 = vld [vmem:[#allocation2 + $0x18] sm:$0xff]
    %v48 = vld [vmem:[#allocation2 + $0x20] sm:$0xff]
    %v49 = vld [vmem:[#allocation2 + $0x28] sm:$0xff]
    %v50 = vld [vmem:[#allocation2 + $0x30] sm:$0xff]
    %v51 = vld [vmem:[#allocation2 + $0x38] sm:$0xff]
    %v52 = vld [vmem:[#allocation2 + $0x40] sm:$0xff]
    %v53 = vld [vmem:[#allocation2 + $0x48] sm:$0xff]
    %v54 = vld [vmem:[#allocation2 + $0x50] sm:$0xff]
    %v55 = vld [vmem:[#allocation2 + $0x58] sm:$0xff]
    %v56 = vld [vmem:[#allocation2 + $0x60] sm:$0xff]
    %v57 = vld [vmem:[#allocation2 + $0x68] sm:$0xff]
    %v58 = vld [vmem:[#allocation2 + $0x70] sm:$0xff]
    %v59 = vld [vmem:[#allocation2 + $0x78] sm:$0xff]
    %v60 = vld [vmem:[#allocation5] sm:$0xff]
    %v61 = vld [vmem:[#allocation5 + $0x8] sm:$0xff]
    %v62 = vld [vmem:[#allocation5 + $0x10] sm:$0xff]
    %v63 = vld [vmem:[#allocation5 + $0x18] sm:$0xff]
    %v64 = vld [vmem:[#allocation5 + $0x20] sm:$0xff]
    %v65 = vld [vmem:[#allocation5 + $0x28] sm:$0xff]
    %v66 = vld [vmem:[#allocation5 + $0x30] sm:$0xff]
    %v67 = vld [vmem:[#allocation5 + $0x38] sm:$0xff]
    %v68 = vld [vmem:[#allocation5 + $0x40] sm:$0xff]
    %v69 = vld [vmem:[#allocation5 + $0x48] sm:$0xff]
    %v70 = vld [vmem:[#allocation5 + $0x50] sm:$0xff]
    %v71 = vld [vmem:[#allocation5 + $0x58] sm:$0xff]
    %v72 = vld [vmem:[#allocation5 + $0x60] sm:$0xff]
    %v73 = vld [vmem:[#allocation5 + $0x68] sm:$0xff]
    %v74 = vld [vmem:[#allocation5 + $0x70] sm:$0xff]
    %v75 = vld [vmem:[#allocation5 + $0x78] sm:$0xff]
    %76 = vmatpush.msra.mxu0 %v75
    %77 = vmatpush.msra.mxu0 %v74
    %78 = vmatpush.msra.mxu0 %v73
    %79 = vmatpush.msra.mxu0 %v72
    %80 = vmatpush.msra.mxu0 %v71
    %81 = vmatpush.msra.mxu0 %v70
    %82 = vmatpush.msra.mxu0 %v69
    %83 = vmatpush.msra.mxu0 %v68
    %84 = vmatpush.msra.mxu0 %v67
    %85 = vmatpush.msra.mxu0 %v66
    %86 = vmatpush.msra.mxu0 %v65
    %87 = vmatpush.msra.mxu0 %v64
    %88 = vmatpush.msra.mxu0 %v63
    %89 = vmatpush.msra.mxu0 %v62
    %90 = vmatpush.msra.mxu0 %v61
    %91 = vmatpush.msra.mxu0 %v60
    %92 = vmatmul.f32.gmra.mxu0 %v44
    %v93 = vpop.f32.mrf.mxu0
    %v94 = vadd.f32 0.0, %v93
    %95 = vmatmul.f32.gmra.mxu0 %v45
    %v96 = vpop.f32.mrf.mxu0
    %v97 = vadd.f32 0.0, %v96
    %98 = vmatmul.f32.gmra.mxu0 %v46
    %v99 = vpop.f32.mrf.mxu0
    %v100 = vadd.f32 0.0, %v99
    %101 = vmatmul.f32.gmra.mxu0 %v47
    %v102 = vpop.f32.mrf.mxu0
    %v103 = vadd.f32 0.0, %v102
    %104 = vmatmul.f32.gmra.mxu0 %v48
    %v105 = vpop.f32.mrf.mxu0
    %v106 = vadd.f32 0.0, %v105
    %107 = vmatmul.f32.gmra.mxu0 %v49
    %v108 = vpop.f32.mrf.mxu0
    %v109 = vadd.f32 0.0, %v108
    %110 = vmatmul.f32.gmra.mxu0 %v50
    %v111 = vpop.f32.mrf.mxu0
    %v112 = vadd.f32 0.0, %v111
    %113 = vmatmul.f32.gmra.mxu0 %v51
    %v114 = vpop.f32.mrf.mxu0
    %v115 = vadd.f32 0.0, %v114
    %116 = vmatmul.f32.gmra.mxu0 %v52
    %v117 = vpop.f32.mrf.mxu0
    %v118 = vadd.f32 0.0, %v117
    %119 = vmatmul.f32.gmra.mxu0 %v53
    %v120 = vpop.f32.mrf.mxu0
    %v121 = vadd.f32 0.0, %v120
    %122 = vmatmul.f32.gmra.mxu0 %v54
    %v123 = vpop.f32.mrf.mxu0
    %v124 = vadd.f32 0.0, %v123
    %125 = vmatmul.f32.gmra.mxu0 %v55
    %v126 = vpop.f32.mrf.mxu0
    %v127 = vadd.f32 0.0, %v126
    %128 = vmatmul.f32.gmra.mxu0 %v56
    %v129 = vpop.f32.mrf.mxu0
    %v130 = vadd.f32 0.0, %v129
    %131 = vmatmul.f32.gmra.mxu0 %v57
    %v132 = vpop.f32.mrf.mxu0
    %v133 = vadd.f32 0.0, %v132
    %134 = vmatmul.f32.gmra.mxu0 %v58
    %v135 = vpop.f32.mrf.mxu0
    %v136 = vadd.f32 0.0, %v135
    %137 = vmatmul.f32.gmra.mxu0 %v59
    %v138 = vpop.f32.mrf.mxu0
    %v139 = vadd.f32 0.0, %v138
    %140 = vdwg.mxu0
    %141 = vst [vmem:[#allocation7] sm:$0xff] %v94
    %142 = vst [vmem:[#allocation7 + $0x8] sm:$0xff] %v97
    %143 = vst [vmem:[#allocation7 + $0x10] sm:$0xff] %v100
    %144 = vst [vmem:[#allocation7 + $0x18] sm:$0xff] %v103
    %145 = vst [vmem:[#allocation7 + $0x20] sm:$0xff] %v106
    %146 = vst [vmem:[#allocation7 + $0x28] sm:$0xff] %v109
    %147 = vst [vmem:[#allocation7 + $0x30] sm:$0xff] %v112
    %148 = vst [vmem:[#allocation7 + $0x38] sm:$0xff] %v115
    %149 = vst [vmem:[#allocation7 + $0x40] sm:$0xff] %v118
    %150 = vst [vmem:[#allocation7 + $0x48] sm:$0xff] %v121
    %151 = vst [vmem:[#allocation7 + $0x50] sm:$0xff] %v124
    %152 = vst [vmem:[#allocation7 + $0x58] sm:$0xff] %v127
    %153 = vst [vmem:[#allocation7 + $0x60] sm:$0xff] %v130
    %154 = vst [vmem:[#allocation7 + $0x68] sm:$0xff] %v133
    %155 = vst [vmem:[#allocation7 + $0x70] sm:$0xff] %v136
    %156 = vst [vmem:[#allocation7 + $0x78] sm:$0xff] %v139
    // Predicated region
    $region18: #{tpu_custom_call.1} parent=1 // pred_check
      _
    $region19: #{tpu_custom_call.1} parent=1 // pred_check_branch
      %158 = sbr.rel (0) target = $region21
    $region20: #{tpu_custom_call.1} parent=1 // pred_region
      %160 = vsyncadd [#allocation4], 0
      %s161 = sshll.u32 [#allocation7], 4
      %s162 = int_to_ptr.vmem [resolvable:$true] %s161
      %s163 = sshll.u32 %s2, 4
      %s164 = int_to_ptr.hbm [resolvable:$true] %s163
      %169 = dma.vmem_to_hbm [thread:$0]  %s162, 2048, %s164, [#allocation4], 128, 128, 8
    $region21: #{tpu_custom_call.1} parent=1 // pred_fallthru
      _
    // Predicated region
    $region22: #{tpu_custom_call.1} parent=1 // pred_check
      _
    $region23: #{tpu_custom_call.1} parent=1 // pred_check_branch
      %171 = sbr.rel (0) target = $region25
    $region24: #{tpu_custom_call.1} parent=1 // pred_region
      %173 = dma.done [#allocation4], 2048
    $region25: #{tpu_custom_call.1} parent=1 // pred_fallthru
      _
    %174 = vsyncpa [#allocation3], 1
    %175 = vsyncpa [#allocation6], 1
    %176 = vsyncpa [#allocation4], 1

</llo_original>
